<compile_context>
chip_gen: v7x
topology: tpu7x:2x2x1
jax: 0.10.0
libtpu: 0.0.40
codegen_flags: <defaults>
</compile_context>

<pallas_src>
import functools

import jax
import jax.numpy as jnp
from jax import lax
from jax.experimental import pallas as pl
from jax.experimental.pallas import tpu as pltpu


def _round_up(x, m):
    return ((x + m - 1) // m) * m


def _apply_nonlin(h, nonlin):
    if nonlin == "tanh":
        return jnp.tanh(h)
    if nonlin == "relu":
        return jnp.maximum(h, 0.0)
    if nonlin == "sigmoid":
        return jax.nn.sigmoid(h)
    # TODO(synk): nonlin='modrelu' (learned per-unit bias) not implemented.
    return h


# ----------------------------------------------------------------------------
# Kernel 1 (one-shot 'calc_rec'):
#   rec = P @ (UppT * M + alpha_block * D) @ P^T
# M (strictly upper triangular) is generated in-kernel with iota; alpha*D is
# reconstructed from two length-H vectors alpha*cos(theta), alpha*sin(theta)
# (rows 0/1 of cs_ref).  Output is cast to the step-weight dtype.
# ----------------------------------------------------------------------------
def build_rec_kernel(p_ref, uppt_ref, cs_ref, rec_ref):
    hp = p_ref.shape[0]
    row = lax.broadcasted_iota(jnp.int32, (hp, hp), 0)
    col = lax.broadcasted_iota(jnp.int32, (hp, hp), 1)

    c = cs_ref[0:1, :]                     # [1, Hp]  alpha*cos(theta), expanded
    s = cs_ref[1:2, :]                     # [1, Hp]  alpha*sin(theta), expanded

    inner = jnp.where(col > row, uppt_ref[...], 0.0)            # UppT * M
    inner = inner + jnp.where(row == col, c, 0.0)                # diag cos
    inner = inner + jnp.where((col == row + 1) & ((row & 1) == 0), -s, 0.0)
    inner = inner + jnp.where((col == row - 1) & ((row & 1) == 1), s, 0.0)

    # rec = (P @ inner) @ P^T  -- contract on P's 2nd axis, no transpose.
    pi = jnp.dot(p_ref[...], inner, preferred_element_type=jnp.float32)
    rec = lax.dot_general(
        pi, p_ref[...],
        dimension_numbers=(((1,), (1,)), ((), ())),
        preferred_element_type=jnp.float32,
    )
    rec_ref[...] = rec.astype(rec_ref.dtype)


def build_weights(u_weight, P, UppT, thetas, alphas, w_dtype=jnp.bfloat16):
    """One-time 'calc_rec' analogue.

    Returns (W_u [I, Hp], rec [Hp, Hp], Hp).  W_u keeps the true input size I
    on its contraction axis so x never needs an HBM pad-copy; only the output
    axis is padded to the lane-dense Hp.
    """
    H = P.shape[0]
    I = u_weight.shape[1]
    Hp = _round_up(H, 128)
    f32 = jnp.float32

    p_pad = jnp.zeros((Hp, Hp), f32).at[:H, :H].set(P.astype(f32))
    uppt_pad = jnp.zeros((Hp, Hp), f32).at[:H, :H].set(UppT.astype(f32))
    c_ext = jnp.repeat(alphas * jnp.cos(thetas), 2)    # [H]
    s_ext = jnp.repeat(alphas * jnp.sin(thetas), 2)    # [H]
    cs_pad = (jnp.zeros((8, Hp), f32)
              .at[0, :H].set(c_ext)
              .at[1, :H].set(s_ext))

    vmem = pl.BlockSpec(memory_space=pltpu.MemorySpace.VMEM)
    rec = pl.pallas_call(
        build_rec_kernel,
        out_shape=jax.ShapeDtypeStruct((Hp, Hp), w_dtype),
        in_specs=[vmem, vmem, vmem],
        out_specs=vmem,
    )(p_pad, uppt_pad, cs_pad)

    wu = (jnp.zeros((I, Hp), f32)
          .at[:, :H].set(u_weight.T.astype(f32))
          .astype(w_dtype))
    return wu, rec, Hp


# ----------------------------------------------------------------------------
# Kernel 2 (sequence): grid=(n_batch_blocks ['parallel'], T//TT ['arbitrary'])
# Per grid step, an unrolled fori_loop runs TT recurrent steps:
#   h = nonlin( x_t @ W_u + hidden @ W_rec )     (two accumulating MXU dots)
# hidden lives in a per-batch-block f32 VMEM scratch across the whole sequence.
# ----------------------------------------------------------------------------
def ortho_seq_kernel(*refs, tt, nonlin, has_h0):
    if has_h0:
        x_ref, wu_ref, wr_ref, h0_ref, out_ref, h_ref = refs
    else:
        x_ref, wu_ref, wr_ref, out_ref, h_ref = refs

    tc = pl.program_id(1)

    @pl.when(tc == 0)
    def _():
        if has_h0:
            h_ref[...] = h0_ref[...]
        else:
            h_ref[...] = jnp.zeros_like(h_ref)

    cdt = wr_ref.dtype   # compute dtype of the MXU operands (bf16 by default)

    def step(i, carry):
        xt = x_ref[i].astype(cdt)                              # (BB, I)
        acc = jnp.dot(xt, wu_ref[...],
                      preferred_element_type=jnp.float32)       # x @ U^T
        acc = acc + jnp.dot(h_ref[...].astype(cdt), wr_ref[...],
                            preferred_element_type=jnp.float32) # h @ rec
        h = _apply_nonlin(acc, nonlin)
        h_ref[...] = h                                          # carry (f32)
        out_ref[i] = h.astype(out_ref.dtype)                    # lane-dense Hp
        return carry

    lax.fori_loop(0, tt, step, 0, unroll=True)


def _run_seq(xs, wu, wr, h0_pad=None, *, nonlin="tanh", tt=16, bb=None):
    T, B, I = xs.shape
    Hp = wr.shape[1]
    bb = B if bb is None else min(bb, B)       # batch block (v7x: ~B/2, mult of 8)
    tt = max(1, min(tt, T))                    # timesteps per grid step
    n_bb = pl.cdiv(B, bb)
    n_tc = pl.cdiv(T, tt)

    has_h0 = h0_pad is not None
    kernel = functools.partial(ortho_seq_kernel, tt=tt, nonlin=nonlin,
                               has_h0=has_h0)

    in_specs = [
        # x streamed unpadded: trailing dims equal the full array dims.
        pl.BlockSpec((tt, bb, I), lambda b, t: (t, b, 0)),
        pl.BlockSpec((I, Hp), lambda b, t: (0, 0)),     # W_u  resident
        pl.BlockSpec((Hp, Hp), lambda b, t: (0, 0)),    # rec  resident
    ]
    args = [xs, wu, wr]
    if has_h0:
        in_specs.append(pl.BlockSpec((bb, Hp), lambda b, t: (b, 0)))
        args.append(h0_pad)

    # Explicit VMEM budget (double-buffered x/out + resident weights + scratch).
    w_bytes = (wu.size + wr.size) * wr.dtype.itemsize
    est = (w_bytes
           + 2 * tt * bb * I * xs.dtype.itemsize
           + 2 * tt * bb * Hp * 4
           + bb * Hp * 4
           + (2 * bb * Hp * 4 if has_h0 else 0))
    vmem_limit = max(32 << 20, min(int(est * 1.5) + (2 << 20), 128 << 20))

    return pl.pallas_call(
        kernel,
        out_shape=jax.ShapeDtypeStruct((T, B, Hp), jnp.float32),
        grid=(n_bb, n_tc),
        in_specs=in_specs,
        out_specs=pl.BlockSpec((tt, bb, Hp), lambda b, t: (t, b, 0)),
        scratch_shapes=[pltpu.VMEM((bb, Hp), jnp.float32)],
        compiler_params=pltpu.CompilerParams(
            dimension_semantics=("parallel", "arbitrary"),
            vmem_limit_bytes=vmem_limit),
    )(*args)


# ----------------------------------------------------------------------------
# Wrappers matching the PyTorch module.
# ----------------------------------------------------------------------------
def ortho_rnn_sequence(xs, u_weight, P, UppT, thetas, alphas, *, hidden=None,
                       nonlin="tanh", w_dtype=jnp.bfloat16, tt=16, bb=None,
                       weights=None):
    """Run the cell over a sequence xs [T, B, I]."""
    T, B, I = xs.shape
    H = P.shape[0]
    if weights is None:
        wu, rec, Hp = build_weights(u_weight, P, UppT, thetas, alphas, w_dtype)
    else:
        wu, rec = weights
        Hp = rec.shape[0]
    h0_pad = None
    if hidden is not None:
        h0_pad = (jnp.zeros((B, Hp), jnp.float32)
                  .at[:, :H].set(hidden.astype(jnp.float32)))
    out = _run_seq(xs, wu, rec, h0_pad, nonlin=nonlin, tt=tt, bb=bb)
    return out[:, :, :H]


def ortho_rnn_forward(x, hidden, u_weight, P, UppT, thetas, alphas, *,
                      nonlin="tanh", w_dtype=jnp.bfloat16):
    """Single-step forward, matching OrthoRNNCell.forward(x, hidden)."""
    out = ortho_rnn_sequence(x[None], u_weight, P, UppT, thetas, alphas,
                             hidden=hidden, nonlin=nonlin, w_dtype=w_dtype,
                             tt=1)
    return out[0]


# ----------------------------------------------------------------------------
# Deterministic parameter construction (glue; mirrors __init__ / calc_rec).
# ----------------------------------------------------------------------------
def make_params(key, inp_size, hid_size):
    k_u, k_logp, k_uppt, k_theta = jax.random.split(key, 4)

    std = (2.0 / (inp_size + hid_size)) ** 0.5
    u_weight = std * jax.random.normal(k_u, (hid_size, inp_size), jnp.float32)

    # P = expm(A) with A skew-symmetric -> orthogonal (stand-in for henaff_init).
    logp = jax.random.normal(k_logp, (hid_size, hid_size), jnp.float32)
    A = jnp.triu(logp, k=1)
    A = A - A.T
    P = jax.scipy.linalg.expm(A)

    # UppT: zeros in __init__; small deterministic values here so the strictly
    # upper-triangular term is exercised (synthetic init, not a checkpoint).
    UppT = 0.1 * jax.random.normal(k_uppt, (hid_size, hid_size), jnp.float32)

    thetas = jax.random.uniform(k_theta, (hid_size // 2,), jnp.float32,
                                minval=0.0, maxval=2 * 3.14)
    alphas = jnp.ones((hid_size // 2,), jnp.float32)
    return u_weight, P, UppT, thetas, alphas


# ----------------------------------------------------------------------------
# Pure-JAX references.
# ----------------------------------------------------------------------------
def reference_rec(P, UppT, thetas, alphas):
    H = P.shape[0]
    M = jnp.triu(jnp.ones((H, H), jnp.float32), k=1)
    idx = jnp.arange(0, H, 2)
    c, s = jnp.cos(thetas), jnp.sin(thetas)
    D = jnp.zeros((H, H), jnp.float32)
    D = D.at[idx, idx].set(c).at[idx, idx + 1].set(-s)
    D = D.at[idx + 1, idx].set(s).at[idx + 1, idx + 1].set(c)
    AB = jnp.zeros((H, H), jnp.float32)
    AB = AB.at[idx, idx].set(alphas).at[idx + 1, idx].set(alphas)
    AB = AB.at[idx, idx + 1].set(alphas).at[idx + 1, idx + 1].set(alphas)
    return P @ (UppT * M + AB * D) @ P.T


def reference_step(x, hidden, u_weight, rec):
    return jnp.tanh(x @ u_weight.T + hidden @ rec)


def reference_seq_quantized(xs, wu, rec, H):
    """Reference using the SAME bf16-quantized weights the kernel uses (so the
    deliberate bf16 cast is not conflated with kernel bugs)."""
    wu_f = wu.astype(jnp.float32)[:, :H]
    rec_f = rec.astype(jnp.float32)[:H, :H]
    B = xs.shape[1]
    h = jnp.zeros((B, H), jnp.float32)
    outs = []
    for t in range(xs.shape[0]):
        x_q = xs[t].astype(jnp.bfloat16).astype(jnp.float32)
        h_q = h.astype(jnp.bfloat16).astype(jnp.float32)
        h = jnp.tanh(x_q @ wu_f + h_q @ rec_f)
        outs.append(h)
    return jnp.stack(outs)


if __name__ == "__main__":
    B, I, H, T = 8, 16, 32, 8  # batch, inp_size, hid_size, seq_len
    key = jax.random.PRNGKey(0)
    k_x, k_p, k_h = jax.random.split(key, 3)

    x_seq = jax.random.normal(k_x, (T, B, I), jnp.float32)
    u_weight, P, UppT, thetas, alphas = make_params(k_p, I, H)
    rec_f32 = reference_rec(P, UppT, thetas, alphas)

    # 1) single-step forward (hidden=None), f32 weights -- the module's forward.
    out1 = ortho_rnn_forward(x_seq[0], None, u_weight, P, UppT, thetas, alphas,
                             w_dtype=jnp.float32)
    out1 = jax.block_until_ready(out1)
    ref1 = reference_step(x_seq[0], jnp.zeros((B, H), jnp.float32),
                          u_weight, rec_f32)
    assert out1.shape == (B, H)
    assert jnp.allclose(out1, ref1, rtol=1e-2, atol=1e-2), \
        "single-step (f32, hidden=None) mismatch vs reference"

    # 2) single-step forward with a provided hidden (exercises the h0 path).
    h_init = 0.5 * jax.random.normal(k_h, (B, H), jnp.float32)
    out2 = ortho_rnn_forward(x_seq[1], h_init, u_weight, P, UppT, thetas,
                             alphas, w_dtype=jnp.float32)
    out2 = jax.block_until_ready(out2)
    ref2 = reference_step(x_seq[1], h_init, u_weight, rec_f32)
    assert jnp.allclose(out2, ref2, rtol=1e-2, atol=1e-2), \
        "single-step (f32, hidden given) mismatch vs reference"

    # 3) full sequence, f32 weights, chunked T (TT=8), hidden starts at zero.
    out3 = ortho_rnn_sequence(x_seq, u_weight, P, UppT, thetas, alphas,
                              w_dtype=jnp.float32, tt=8)
    out3 = jax.block_until_ready(out3)
    h = jnp.zeros((B, H), jnp.float32)
    refs = []
    for t in range(T):
        h = reference_step(x_seq[t], h, u_weight, rec_f32)
        refs.append(h)
    ref3 = jnp.stack(refs)
    assert out3.shape == (T, B, H)
    assert jnp.allclose(out3, ref3, rtol=1e-2, atol=1e-2), \
        "sequence (f32) mismatch vs reference"

    # 4) full sequence, default bf16 weights, checked against a reference that
    #    uses the identical bf16-quantized weights.
    wu_bf, rec_bf, _ = build_weights(u_weight, P, UppT, thetas, alphas,
                                     w_dtype=jnp.bfloat16)
    out4 = ortho_rnn_sequence(x_seq, u_weight, P, UppT, thetas, alphas,
                              weights=(wu_bf, rec_bf), tt=8)
    out4 = jax.block_until_ready(out4)
    ref4 = reference_seq_quantized(x_seq, wu_bf, rec_bf, H)
    assert jnp.allclose(out4, ref4, rtol=1e-2, atol=1e-2), \
        "sequence (bf16) mismatch vs quantized reference"

    print("KERNEL_OK")
</pallas_src>

<mosaic_0001>
module attributes {stable_mosaic.version = 11 : i64} {
  func.func @build_rec_kernel(%arg0: memref<128x128xf32, #tpu.memory_space<vmem>>, %arg1: memref<128x128xf32, #tpu.memory_space<vmem>>, %arg2: memref<8x128xf32, #tpu.memory_space<vmem>>, %arg3: memref<128x128xf32, #tpu.memory_space<vmem>>) attributes {dimension_semantics = [], scalar_prefetch = 0 : i64, scratch_operands = 0 : i64, tpu.core_type = #tpu.core_type<tc>} {
    %0 = tpu.iota {dimensions = array<i32: 0>} : vector<128x128xi32>
    %1 = tpu.iota {dimensions = array<i32: 1>} : vector<128x128xi32>
    %c0 = arith.constant 0 : index
    %c0_0 = arith.constant 0 : index
    %2 = vector.load %arg2[%c0, %c0_0] : memref<8x128xf32, #tpu.memory_space<vmem>>, vector<1x128xf32>
    %c1 = arith.constant 1 : index
    %c0_1 = arith.constant 0 : index
    %3 = vector.load %arg2[%c1, %c0_1] : memref<8x128xf32, #tpu.memory_space<vmem>>, vector<1x128xf32>
    %4 = arith.cmpi sgt, %1, %0 : vector<128x128xi32>
    %c0_2 = arith.constant 0 : index
    %c0_3 = arith.constant 0 : index
    %5 = vector.load %arg1[%c0_2, %c0_3] : memref<128x128xf32, #tpu.memory_space<vmem>>, vector<128x128xf32>
    %cst = arith.constant 0.000000e+00 : f32
    %6 = vector.broadcast %cst : f32 to vector<128x128xf32>
    %7 = arith.select %4, %5, %6 : vector<128x128xi1>, vector<128x128xf32>
    %8 = arith.cmpi eq, %0, %1 : vector<128x128xi32>
    %cst_4 = arith.constant 0.000000e+00 : f32
    %9 = vector.shape_cast %2 : vector<1x128xf32> to vector<1x128xf32>
    %10 = vector.broadcast %9 : vector<1x128xf32> to vector<128x128xf32>
    %11 = vector.broadcast %cst_4 : f32 to vector<128x128xf32>
    %12 = arith.select %8, %10, %11 : vector<128x128xi1>, vector<128x128xf32>
    %13 = arith.addf %7, %12 : vector<128x128xf32>
    %c1_i32 = arith.constant 1 : i32
    %14 = vector.broadcast %c1_i32 : i32 to vector<128x128xi32>
    %15 = arith.addi %0, %14 : vector<128x128xi32>
    %16 = arith.cmpi eq, %1, %15 : vector<128x128xi32>
    %c1_i32_5 = arith.constant 1 : i32
    %17 = vector.broadcast %c1_i32_5 : i32 to vector<128x128xi32>
    %18 = arith.andi %0, %17 : vector<128x128xi32>
    %c0_i32 = arith.constant 0 : i32
    %19 = vector.broadcast %c0_i32 : i32 to vector<128x128xi32>
    %20 = arith.cmpi eq, %18, %19 : vector<128x128xi32>
    %21 = arith.andi %16, %20 : vector<128x128xi1>
    %cst_6 = arith.constant 0.000000e+00 : f32
    %22 = vector.broadcast %cst_6 : f32 to vector<1x128xf32>
    %23 = arith.subf %22, %3 : vector<1x128xf32>
    %cst_7 = arith.constant 0.000000e+00 : f32
    %24 = vector.shape_cast %23 : vector<1x128xf32> to vector<1x128xf32>
    %25 = vector.broadcast %24 : vector<1x128xf32> to vector<128x128xf32>
    %26 = vector.broadcast %cst_7 : f32 to vector<128x128xf32>
    %27 = arith.select %21, %25, %26 : vector<128x128xi1>, vector<128x128xf32>
    %28 = arith.addf %13, %27 : vector<128x128xf32>
    %c1_i32_8 = arith.constant 1 : i32
    %29 = vector.broadcast %c1_i32_8 : i32 to vector<128x128xi32>
    %30 = arith.subi %0, %29 : vector<128x128xi32>
    %31 = arith.cmpi eq, %1, %30 : vector<128x128xi32>
    %c1_i32_9 = arith.constant 1 : i32
    %32 = vector.broadcast %c1_i32_9 : i32 to vector<128x128xi32>
    %33 = arith.andi %0, %32 : vector<128x128xi32>
    %c1_i32_10 = arith.constant 1 : i32
    %34 = vector.broadcast %c1_i32_10 : i32 to vector<128x128xi32>
    %35 = arith.cmpi eq, %33, %34 : vector<128x128xi32>
    %36 = arith.andi %31, %35 : vector<128x128xi1>
    %cst_11 = arith.constant 0.000000e+00 : f32
    %37 = vector.shape_cast %3 : vector<1x128xf32> to vector<1x128xf32>
    %38 = vector.broadcast %37 : vector<1x128xf32> to vector<128x128xf32>
    %39 = vector.broadcast %cst_11 : f32 to vector<128x128xf32>
    %40 = arith.select %36, %38, %39 : vector<128x128xi1>, vector<128x128xf32>
    %41 = arith.addf %28, %40 : vector<128x128xf32>
    %c0_12 = arith.constant 0 : index
    %c0_13 = arith.constant 0 : index
    %42 = vector.load %arg0[%c0_12, %c0_13] : memref<128x128xf32, #tpu.memory_space<vmem>>, vector<128x128xf32>
    %cst_14 = arith.constant dense<0.000000e+00> : vector<128x128xf32>
    %43 = tpu.matmul %42, %41, %cst_14 {dimension_numbers = #tpu.dot_dimension_numbers<[1], [0], [0], [1], [0, 0, 1, 1], [], []>} : vector<128x128xf32>, vector<128x128xf32>, vector<128x128xf32> -> vector<128x128xf32>
    %c0_15 = arith.constant 0 : index
    %c0_16 = arith.constant 0 : index
    %44 = vector.load %arg0[%c0_15, %c0_16] : memref<128x128xf32, #tpu.memory_space<vmem>>, vector<128x128xf32>
    %cst_17 = arith.constant dense<0.000000e+00> : vector<128x128xf32>
    %45 = tpu.matmul %43, %44, %cst_17 {dimension_numbers = #tpu.dot_dimension_numbers<[1], [1], [0], [0], [0, 0, 1, 0], [], []>} : vector<128x128xf32>, vector<128x128xf32>, vector<128x128xf32> -> vector<128x128xf32>
    %c0_18 = arith.constant 0 : index
    %c0_19 = arith.constant 0 : index
    %46 = vector.load %arg3[%c0_18, %c0_19] : memref<128x128xf32, #tpu.memory_space<vmem>>, vector<128x128xf32>
    tpu.vector_store %arg3[%c0_18, %c0_19], %45 {strides = array<i32>} : memref<128x128xf32, #tpu.memory_space<vmem>>, vector<128x128xf32>,
    return
  }
}

</mosaic_0001>

<llo_original>
// kernel: tpu_custom_call.1
$region0: #{tpu_custom_call.1}
  #allocation0 [shape = 'u32[]', space=smem, size = 0x4, offset = 0x4, fixed_abs, tag = 'smem constant byte address 0x4 - core index']
  #allocation1 [shape = 'u32[144,128]{1,0:T(1,128)}', space=vmem, size = 0x12000, scoped, tag = 'internal scratch']
  %s0 = inlined_call_operand.hbm [shape: f32[128,128], index: 0, kind: input, shape index: {}]
  %s1 = inlined_call_operand.hbm [shape: f32[128,128], index: 1, kind: input, shape index: {}]
  %s2 = inlined_call_operand.hbm [shape: f32[8,128], index: 2, kind: input, shape index: {}]
  %s3 = inlined_call_operand.hbm [shape: f32[128,128], index: 3, kind: output, shape index: {}]
  %s4 = sld [smem:[#allocation0]]
  $region34: #{tpu_custom_call.1} parent=0
    _
  %s6 = ssub.s32 1, %s4
  %s7 = scalar_select 0, %s6, %s4
  $region1: #{tpu_custom_call.1} parent=0
    #allocation2 [shape = 'u8[65536]{0}', space=vmem, size = 0x10000, scoped, tag = 'input window, operand 0, single buffered']
    #allocation3 [shape = 's32[1]{0}', space=sflag, size = 0x4, scoped, tag = 'scoped memory for tpu_custom_call.1']
    #allocation4 [shape = 's32[1]{0}', space=sflag, size = 0x4, scoped, tag = 'scoped memory for tpu_custom_call.1']
    #allocation5 [shape = 'u8[65536]{0}', space=vmem, size = 0x10000, scoped, tag = 'input window, operand 1, single buffered']
    #allocation6 [shape = 's32[1]{0}', space=sflag, size = 0x4, scoped, tag = 'scoped memory for tpu_custom_call.1']
    #allocation7 [shape = 'u8[4096]{0}', space=vmem, size = 0x1000, scoped, tag = 'input window, operand 2, single buffered']
    #allocation8 [shape = 'u8[65536]{0}', space=vmem, size = 0x10000, scoped, tag = 'output window, operand 0, single buffered']
    %8 = vsyncpa [#allocation3], 0
    %9 = vsyncpa [#allocation6], 0
    %10 = vsyncpa [#allocation4], 0
    // Predicated region
    $region2: #{tpu_custom_call.1} parent=1 // pred_check
      _
    $region3: #{tpu_custom_call.1} parent=1 // pred_check_branch
      %12 = sbr.rel (0) target = $region5
    $region4: #{tpu_custom_call.1} parent=1 // pred_region
      %s14 = ssub.s32 2048, 2048
      %15 = vsyncadd [#allocation3], %s14
      %s16 = sshll.u32 [#allocation2], 4
      %s17 = int_to_ptr.vmem [resolvable:$true] %s16
      %22 = dma.hbm_to_vmem [thread:$0]  %s0, 2048, %s17, [#allocation3], 128, 128, 8
    $region5: #{tpu_custom_call.1} parent=1 // pred_fallthru
      _
    // Predicated region
    $region6: #{tpu_custom_call.1} parent=1 // pred_check
      _
    $region7: #{tpu_custom_call.1} parent=1 // pred_check_branch
      %24 = sbr.rel (0) target = $region9
    $region8: #{tpu_custom_call.1} parent=1 // pred_region
      %s26 = ssub.s32 2048, 2048
      %27 = vsyncadd [#allocation6], %s26
      %s28 = sshll.u32 [#allocation5], 4
      %s29 = int_to_ptr.vmem [resolvable:$true] %s28
      %34 = dma.hbm_to_vmem [thread:$0]  %s1, 2048, %s29, [#allocation6], 128, 128, 8
    $region9: #{tpu_custom_call.1} parent=1 // pred_fallthru
      _
    // Predicated region
    $region10: #{tpu_custom_call.1} parent=1 // pred_check
      _
    $region11: #{tpu_custom_call.1} parent=1 // pred_check_branch
      %36 = sbr.rel (0) target = $region13
    $region12: #{tpu_custom_call.1} parent=1 // pred_region
      %s38 = ssub.s32 128, 128
      %39 = vsyncadd [#allocation6], %s38
      %s41 = sshll.u32 [#allocation7], 4
      %s42 = int_to_ptr.vmem [resolvable:$true] %s41
      %44 = dma.hbm_to_vmem [thread:$0]  %s2, 128, %s42, [#allocation6]
    $region13: #{tpu_custom_call.1} parent=1 // pred_fallthru
      _
    // Predicated region
    $region14: #{tpu_custom_call.1} parent=1 // pred_check
      _
    $region15: #{tpu_custom_call.1} parent=1 // pred_check_branch
      %46 = sbr.rel (0) target = $region17
    $region16: #{tpu_custom_call.1} parent=1 // pred_region
      %47 = dma.done [#allocation3], 2048
    $region17: #{tpu_custom_call.1} parent=1 // pred_fallthru
      _
    // Predicated region
    $region18: #{tpu_custom_call.1} parent=1 // pred_check
      _
    $region19: #{tpu_custom_call.1} parent=1 // pred_check_branch
      %49 = sbr.rel (0) target = $region21
    $region20: #{tpu_custom_call.1} parent=1 // pred_region
      %50 = dma.done [#allocation6], 2048
    $region21: #{tpu_custom_call.1} parent=1 // pred_fallthru
      _
    // Predicated region
    $region22: #{tpu_custom_call.1} parent=1 // pred_check
      _
    $region23: #{tpu_custom_call.1} parent=1 // pred_check_branch
      %52 = sbr.rel (0) target = $region25
    $region24: #{tpu_custom_call.1} parent=1 // pred_region
      %53 = dma.done [#allocation6], 128
    $region25: #{tpu_custom_call.1} parent=1 // pred_fallthru
      _
    %v54 = vlaneseq
    %v55 = vshrl.u32 %v54, 7
    %v56 = vadd.s32 %v55, 8
    %v57 = vadd.s32 %v55, 16
    %v58 = vadd.s32 %v55, 24
    %v59 = vadd.s32 %v55, 32
    %v60 = vadd.s32 %v55, 40
    %v61 = vadd.s32 %v55, 48
    %v62 = vadd.s32 %v55, 56
    %v63 = vadd.s32 %v55, 64
    %v64 = vadd.s32 %v55, 72
    %v65 = vadd.s32 %v55, 80
    %v66 = vadd.s32 %v55, 88
    %v67 = vadd.s32 %v55, 96
    %v68 = vadd.s32 %v55, 104
    %v69 = vadd.s32 %v55, 112
    %v70 = vadd.s32 %v55, 120
    %v71 = vlaneseq
    %v72 = vand.u32 %v71, 127
    %v73 = vld [vmem:[#allocation7] sm:$0x1]
    %v74 = vld [vmem:[#allocation7 + $0x1] sm:$0x1]
    %vm75 = vcmp.gt.s32.totalorder %v72, %v55
    %vm76 = vcmp.gt.s32.totalorder %v72, %v56
    %vm77 = vcmp.gt.s32.totalorder %v72, %v57
    %vm78 = vcmp.gt.s32.totalorder %v72, %v58
    %vm79 = vcmp.gt.s32.totalorder %v72, %v59
    %vm80 = vcmp.gt.s32.totalorder %v72, %v60
    %vm81 = vcmp.gt.s32.totalorder %v72, %v61
    %vm82 = vcmp.gt.s32.totalorder %v72, %v62
    %vm83 = vcmp.gt.s32.totalorder %v72, %v63
    %vm84 = vcmp.gt.s32.totalorder %v72, %v64
    %vm85 = vcmp.gt.s32.totalorder %v72, %v65
    %vm86 = vcmp.gt.s32.totalorder %v72, %v66
    %vm87 = vcmp.gt.s32.totalorder %v72, %v67
    %vm88 = vcmp.gt.s32.totalorder %v72, %v68
    %vm89 = vcmp.gt.s32.totalorder %v72, %v69
    %vm90 = vcmp.gt.s32.totalorder %v72, %v70
    %v91 = vld [vmem:[#allocation5] sm:$0xff]
    %v92 = vld [vmem:[#allocation5 + $0x8] sm:$0xff]
    %v93 = vld [vmem:[#allocation5 + $0x10] sm:$0xff]
    %v94 = vld [vmem:[#allocation5 + $0x18] sm:$0xff]
    %v95 = vld [vmem:[#allocation5 + $0x20] sm:$0xff]
    %v96 = vld [vmem:[#allocation5 + $0x28] sm:$0xff]
    %v97 = vld [vmem:[#allocation5 + $0x30] sm:$0xff]
    %v98 = vld [vmem:[#allocation5 + $0x38] sm:$0xff]
    %v99 = vld [vmem:[#allocation5 + $0x40] sm:$0xff]
    %v100 = vld [vmem:[#allocation5 + $0x48] sm:$0xff]
    %v101 = vld [vmem:[#allocation5 + $0x50] sm:$0xff]
    %v102 = vld [vmem:[#allocation5 + $0x58] sm:$0xff]
    %v103 = vld [vmem:[#allocation5 + $0x60] sm:$0xff]
    %v104 = vld [vmem:[#allocation5 + $0x68] sm:$0xff]
    %v105 = vld [vmem:[#allocation5 + $0x70] sm:$0xff]
    %v106 = vld [vmem:[#allocation5 + $0x78] sm:$0xff]
    %v107 = vsel %vm75, %v91, 0.0
    %v108 = vsel %vm76, %v92, 0.0
    %v109 = vsel %vm77, %v93, 0.0
    %v110 = vsel %vm78, %v94, 0.0
    %v111 = vsel %vm79, %v95, 0.0
    %v112 = vsel %vm80, %v96, 0.0
    %v113 = vsel %vm81, %v97, 0.0
    %v114 = vsel %vm82, %v98, 0.0
    %v115 = vsel %vm83, %v99, 0.0
    %v116 = vsel %vm84, %v100, 0.0
    %v117 = vsel %vm85, %v101, 0.0
    %v118 = vsel %vm86, %v102, 0.0
    %v119 = vsel %vm87, %v103, 0.0
    %v120 = vsel %vm88, %v104, 0.0
    %v121 = vsel %vm89, %v105, 0.0
    %v122 = vsel %vm90, %v106, 0.0
    %vm123 = vcmp.eq.s32.totalorder %v55, %v72
    %vm124 = vcmp.eq.s32.totalorder %v56, %v72
    %vm125 = vcmp.eq.s32.totalorder %v57, %v72
    %vm126 = vcmp.eq.s32.totalorder %v58, %v72
    %vm127 = vcmp.eq.s32.totalorder %v59, %v72
    %vm128 = vcmp.eq.s32.totalorder %v60, %v72
    %vm129 = vcmp.eq.s32.totalorder %v61, %v72
    %vm130 = vcmp.eq.s32.totalorder %v62, %v72
    %vm131 = vcmp.eq.s32.totalorder %v63, %v72
    %vm132 = vcmp.eq.s32.totalorder %v64, %v72
    %vm133 = vcmp.eq.s32.totalorder %v65, %v72
    %vm134 = vcmp.eq.s32.totalorder %v66, %v72
    %vm135 = vcmp.eq.s32.totalorder %v67, %v72
    %vm136 = vcmp.eq.s32.totalorder %v68, %v72
    %vm137 = vcmp.eq.s32.totalorder %v69, %v72
    %vm138 = vcmp.eq.s32.totalorder %v70, %v72
    %v139 = vlaneseq
    %v140 = vshrl.u32 %v139, 7
    %v141 = vsub.s32 0, %v140
    %v142 = vrot.slane %v73, %v141
    %v143 = vsel %vm123, %v142, 0.0
    %v144 = vsel %vm124, %v142, 0.0
    %v145 = vsel %vm125, %v142, 0.0
    %v146 = vsel %vm126, %v142, 0.0
    %v147 = vsel %vm127, %v142, 0.0
    %v148 = vsel %vm128, %v142, 0.0
    %v149 = vsel %vm129, %v142, 0.0
    %v150 = vsel %vm130, %v142, 0.0
    %v151 = vsel %vm131, %v142, 0.0
    %v152 = vsel %vm132, %v142, 0.0
    %v153 = vsel %vm133, %v142, 0.0
    %v154 = vsel %vm134, %v142, 0.0
    %v155 = vsel %vm135, %v142, 0.0
    %v156 = vsel %vm136, %v142, 0.0
    %v157 = vsel %vm137, %v142, 0.0
    %v158 = vsel %vm138, %v142, 0.0
    %v159 = vadd.f32 %v107, %v143
    %v160 = vadd.f32 %v108, %v144
    %v161 = vadd.f32 %v109, %v145
    %v162 = vadd.f32 %v110, %v146
    %v163 = vadd.f32 %v111, %v147
    %v164 = vadd.f32 %v112, %v148
    %v165 = vadd.f32 %v113, %v149
    %v166 = vadd.f32 %v114, %v150
    %v167 = vadd.f32 %v115, %v151
    %v168 = vadd.f32 %v116, %v152
    %v169 = vadd.f32 %v117, %v153
    %v170 = vadd.f32 %v118, %v154
    %v171 = vadd.f32 %v119, %v155
    %v172 = vadd.f32 %v120, %v156
    %v173 = vadd.f32 %v121, %v157
    %v174 = vadd.f32 %v122, %v158
    %v175 = vadd.s32 %v55, 1
    %v176 = vadd.s32 %v56, 1
    %v177 = vadd.s32 %v57, 1
    %v178 = vadd.s32 %v58, 1
    %v179 = vadd.s32 %v59, 1
    %v180 = vadd.s32 %v60, 1
    %v181 = vadd.s32 %v61, 1
    %v182 = vadd.s32 %v62, 1
    %v183 = vadd.s32 %v63, 1
    %v184 = vadd.s32 %v64, 1
    %v185 = vadd.s32 %v65, 1
    %v186 = vadd.s32 %v66, 1
    %v187 = vadd.s32 %v67, 1
    %v188 = vadd.s32 %v68, 1
    %v189 = vadd.s32 %v69, 1
    %v190 = vadd.s32 %v70, 1
    %vm191 = vcmp.eq.s32.totalorder %v72, %v175
    %vm192 = vcmp.eq.s32.totalorder %v72, %v176
    %vm193 = vcmp.eq.s32.totalorder %v72, %v177
    %vm194 = vcmp.eq.s32.totalorder %v72, %v178
    %vm195 = vcmp.eq.s32.totalorder %v72, %v179
    %vm196 = vcmp.eq.s32.totalorder %v72, %v180
    %vm197 = vcmp.eq.s32.totalorder %v72, %v181
    %vm198 = vcmp.eq.s32.totalorder %v72, %v182
    %vm199 = vcmp.eq.s32.totalorder %v72, %v183
    %vm200 = vcmp.eq.s32.totalorder %v72, %v184
    %vm201 = vcmp.eq.s32.totalorder %v72, %v185
    %vm202 = vcmp.eq.s32.totalorder %v72, %v186
    %vm203 = vcmp.eq.s32.totalorder %v72, %v187
    %vm204 = vcmp.eq.s32.totalorder %v72, %v188
    %vm205 = vcmp.eq.s32.totalorder %v72, %v189
    %vm206 = vcmp.eq.s32.totalorder %v72, %v190
    %v207 = vand.u32 %v55, 1
    %v208 = vand.u32 %v56, 1
    %v209 = vand.u32 %v57, 1
    %v210 = vand.u32 %v58, 1
    %v211 = vand.u32 %v59, 1
    %v212 = vand.u32 %v60, 1
    %v213 = vand.u32 %v61, 1
    %v214 = vand.u32 %v62, 1
    %v215 = vand.u32 %v63, 1
    %v216 = vand.u32 %v64, 1
    %v217 = vand.u32 %v65, 1
    %v218 = vand.u32 %v66, 1
    %v219 = vand.u32 %v67, 1
    %v220 = vand.u32 %v68, 1
    %v221 = vand.u32 %v69, 1
    %v222 = vand.u32 %v70, 1
    %vm223 = vcmp.eq.s32.totalorder %v207, 0
    %vm224 = vcmp.eq.s32.totalorder %v208, 0
    %vm225 = vcmp.eq.s32.totalorder %v209, 0
    %vm226 = vcmp.eq.s32.totalorder %v210, 0
    %vm227 = vcmp.eq.s32.totalorder %v211, 0
    %vm228 = vcmp.eq.s32.totalorder %v212, 0
    %vm229 = vcmp.eq.s32.totalorder %v213, 0
    %vm230 = vcmp.eq.s32.totalorder %v214, 0
    %vm231 = vcmp.eq.s32.totalorder %v215, 0
    %vm232 = vcmp.eq.s32.totalorder %v216, 0
    %vm233 = vcmp.eq.s32.totalorder %v217, 0
    %vm234 = vcmp.eq.s32.totalorder %v218, 0
    %vm235 = vcmp.eq.s32.totalorder %v219, 0
    %vm236 = vcmp.eq.s32.totalorder %v220, 0
    %vm237 = vcmp.eq.s32.totalorder %v221, 0
    %vm238 = vcmp.eq.s32.totalorder %v222, 0
    %vm239 = vmand %vm191, %vm223
    %vm240 = vmand %vm192, %vm224
    %vm241 = vmand %vm193, %vm225
    %vm242 = vmand %vm194, %vm226
    %vm243 = vmand %vm195, %vm227
    %vm244 = vmand %vm196, %vm228
    %vm245 = vmand %vm197, %vm229
    %vm246 = vmand %vm198, %vm230
    %vm247 = vmand %vm199, %vm231
    %vm248 = vmand %vm200, %vm232
    %vm249 = vmand %vm201, %vm233
    %vm250 = vmand %vm202, %vm234
    %vm251 = vmand %vm203, %vm235
    %vm252 = vmand %vm204, %vm236
    %vm253 = vmand %vm205, %vm237
    %vm254 = vmand %vm206, %vm238
    %v255 = vsub.f32 0.0, %v74
    %v256 = vlaneseq
    %v257 = vshrl.u32 %v256, 7
    %v258 = vsub.s32 0, %v257
    %v259 = vrot.slane %v255, %v258
    %v260 = vsel %vm239, %v259, 0.0
    %v261 = vsel %vm240, %v259, 0.0
    %v262 = vsel %vm241, %v259, 0.0
    %v263 = vsel %vm242, %v259, 0.0
    %v264 = vsel %vm243, %v259, 0.0
    %v265 = vsel %vm244, %v259, 0.0
    %v266 = vsel %vm245, %v259, 0.0
    %v267 = vsel %vm246, %v259, 0.0
    %v268 = vsel %vm247, %v259, 0.0
    %v269 = vsel %vm248, %v259, 0.0
    %v270 = vsel %vm249, %v259, 0.0
    %v271 = vsel %vm250, %v259, 0.0
    %v272 = vsel %vm251, %v259, 0.0
    %v273 = vsel %vm252, %v259, 0.0
    %v274 = vsel %vm253, %v259, 0.0
    %v275 = vsel %vm254, %v259, 0.0
    %v276 = vadd.f32 %v159, %v260
    %v277 = vadd.f32 %v160, %v261
    %v278 = vadd.f32 %v161, %v262
    %v279 = vadd.f32 %v162, %v263
    %v280 = vadd.f32 %v163, %v264
    %v281 = vadd.f32 %v164, %v265
    %v282 = vadd.f32 %v165, %v266
    %v283 = vadd.f32 %v166, %v267
    %v284 = vadd.f32 %v167, %v268
    %v285 = vadd.f32 %v168, %v269
    %v286 = vadd.f32 %v169, %v270
    %v287 = vadd.f32 %v170, %v271
    %v288 = vadd.f32 %v171, %v272
    %v289 = vadd.f32 %v172, %v273
    %v290 = vadd.f32 %v173, %v274
    %v291 = vadd.f32 %v174, %v275
    %v292 = vsub.s32 %v55, 1
    %v293 = vsub.s32 %v56, 1
    %v294 = vsub.s32 %v57, 1
    %v295 = vsub.s32 %v58, 1
    %v296 = vsub.s32 %v59, 1
    %v297 = vsub.s32 %v60, 1
    %v298 = vsub.s32 %v61, 1
    %v299 = vsub.s32 %v62, 1
    %v300 = vsub.s32 %v63, 1
    %v301 = vsub.s32 %v64, 1
    %v302 = vsub.s32 %v65, 1
    %v303 = vsub.s32 %v66, 1
    %v304 = vsub.s32 %v67, 1
    %v305 = vsub.s32 %v68, 1
    %v306 = vsub.s32 %v69, 1
    %v307 = vsub.s32 %v70, 1
    %vm308 = vcmp.eq.s32.totalorder %v72, %v292
    %vm309 = vcmp.eq.s32.totalorder %v72, %v293
    %vm310 = vcmp.eq.s32.totalorder %v72, %v294
    %vm311 = vcmp.eq.s32.totalorder %v72, %v295
    %vm312 = vcmp.eq.s32.totalorder %v72, %v296
    %vm313 = vcmp.eq.s32.totalorder %v72, %v297
    %vm314 = vcmp.eq.s32.totalorder %v72, %v298
    %vm315 = vcmp.eq.s32.totalorder %v72, %v299
    %vm316 = vcmp.eq.s32.totalorder %v72, %v300
    %vm317 = vcmp.eq.s32.totalorder %v72, %v301
    %vm318 = vcmp.eq.s32.totalorder %v72, %v302
    %vm319 = vcmp.eq.s32.totalorder %v72, %v303
    %vm320 = vcmp.eq.s32.totalorder %v72, %v304
    %vm321 = vcmp.eq.s32.totalorder %v72, %v305
    %vm322 = vcmp.eq.s32.totalorder %v72, %v306
    %vm323 = vcmp.eq.s32.totalorder %v72, %v307
    %vm324 = vcmp.eq.s32.totalorder %v207, 1
    %vm325 = vcmp.eq.s32.totalorder %v208, 1
    %vm326 = vcmp.eq.s32.totalorder %v209, 1
    %vm327 = vcmp.eq.s32.totalorder %v210, 1
    %vm328 = vcmp.eq.s32.totalorder %v211, 1
    %vm329 = vcmp.eq.s32.totalorder %v212, 1
    %vm330 = vcmp.eq.s32.totalorder %v213, 1
    %vm331 = vcmp.eq.s32.totalorder %v214, 1
    %vm332 = vcmp.eq.s32.totalorder %v215, 1
    %vm333 = vcmp.eq.s32.totalorder %v216, 1
    %vm334 = vcmp.eq.s32.totalorder %v217, 1
    %vm335 = vcmp.eq.s32.totalorder %v218, 1
    %vm336 = vcmp.eq.s32.totalorder %v219, 1
    %vm337 = vcmp.eq.s32.totalorder %v220, 1
    %vm338 = vcmp.eq.s32.totalorder %v221, 1
    %vm339 = vcmp.eq.s32.totalorder %v222, 1
    %vm340 = vmand %vm308, %vm324
    %vm341 = vmand %vm309, %vm325
    %vm342 = vmand %vm310, %vm326
    %vm343 = vmand %vm311, %vm327
    %vm344 = vmand %vm312, %vm328
    %vm345 = vmand %vm313, %vm329
    %vm346 = vmand %vm314, %vm330
    %vm347 = vmand %vm315, %vm331
    %vm348 = vmand %vm316, %vm332
    %vm349 = vmand %vm317, %vm333
    %vm350 = vmand %vm318, %vm334
    %vm351 = vmand %vm319, %vm335
    %vm352 = vmand %vm320, %vm336
    %vm353 = vmand %vm321, %vm337
    %vm354 = vmand %vm322, %vm338
    %vm355 = vmand %vm323, %vm339
    %v356 = vlaneseq
    %v357 = vshrl.u32 %v356, 7
    %v358 = vsub.s32 0, %v357
    %v359 = vrot.slane %v74, %v358
    %v360 = vsel %vm340, %v359, 0.0
    %v361 = vsel %vm341, %v359, 0.0
    %v362 = vsel %vm342, %v359, 0.0
    %v363 = vsel %vm343, %v359, 0.0
    %v364 = vsel %vm344, %v359, 0.0
    %v365 = vsel %vm345, %v359, 0.0
    %v366 = vsel %vm346, %v359, 0.0
    %v367 = vsel %vm347, %v359, 0.0
    %v368 = vsel %vm348, %v359, 0.0
    %v369 = vsel %vm349, %v359, 0.0
    %v370 = vsel %vm350, %v359, 0.0
    %v371 = vsel %vm351, %v359, 0.0
    %v372 = vsel %vm352, %v359, 0.0
    %v373 = vsel %vm353, %v359, 0.0
    %v374 = vsel %vm354, %v359, 0.0
    %v375 = vsel %vm355, %v359, 0.0
    %v376 = vadd.f32 %v276, %v360
    %v377 = vadd.f32 %v277, %v361
    %v378 = vadd.f32 %v278, %v362
    %v379 = vadd.f32 %v279, %v363
    %v380 = vadd.f32 %v280, %v364
    %v381 = vadd.f32 %v281, %v365
    %v382 = vadd.f32 %v282, %v366
    %v383 = vadd.f32 %v283, %v367
    %v384 = vadd.f32 %v284, %v368
    %v385 = vadd.f32 %v285, %v369
    %v386 = vadd.f32 %v286, %v370
    %v387 = vadd.f32 %v287, %v371
    %v388 = vadd.f32 %v288, %v372
    %v389 = vadd.f32 %v289, %v373
    %v390 = vadd.f32 %v290, %v374
    %v391 = vadd.f32 %v291, %v375
    %v392 = vld [vmem:[#allocation2] sm:$0xff]
    %v393 = vld [vmem:[#allocation2 + $0x8] sm:$0xff]
    %v394 = vld [vmem:[#allocation2 + $0x10] sm:$0xff]
    %v395 = vld [vmem:[#allocation2 + $0x18] sm:$0xff]
    %v396 = vld [vmem:[#allocation2 + $0x20] sm:$0xff]
    %v397 = vld [vmem:[#allocation2 + $0x28] sm:$0xff]
    %v398 = vld [vmem:[#allocation2 + $0x30] sm:$0xff]
    %v399 = vld [vmem:[#allocation2 + $0x38] sm:$0xff]
    %v400 = vld [vmem:[#allocation2 + $0x40] sm:$0xff]
    %v401 = vld [vmem:[#allocation2 + $0x48] sm:$0xff]
    %v402 = vld [vmem:[#allocation2 + $0x50] sm:$0xff]
    %v403 = vld [vmem:[#allocation2 + $0x58] sm:$0xff]
    %v404 = vld [vmem:[#allocation2 + $0x60] sm:$0xff]
    %v405 = vld [vmem:[#allocation2 + $0x68] sm:$0xff]
    %v406 = vld [vmem:[#allocation2 + $0x70] sm:$0xff]
    %v407 = vld [vmem:[#allocation2 + $0x78] sm:$0xff]
    %408 = vmatprep.subr.mxu0 0.0
    %409 = vmatpush1.msra.mxu0 %v376
    %410 = vmatprep.subr.mxu0 0.0
    %411 = vmatpush1.msra.mxu0 %v377
    %412 = vmatprep.subr.mxu0 0.0
    %413 = vmatpush1.msra.mxu0 %v378
    %414 = vmatprep.subr.mxu0 0.0
    %415 = vmatpush1.msra.mxu0 %v379
    %416 = vmatprep.subr.mxu0 0.0
    %417 = vmatpush1.msra.mxu0 %v380
    %418 = vmatprep.subr.mxu0 0.0
    %419 = vmatpush1.msra.mxu0 %v381
    %420 = vmatprep.subr.mxu0 0.0
    %421 = vmatpush1.msra.mxu0 %v382
    %422 = vmatprep.subr.mxu0 0.0
    %423 = vmatpush1.msra.mxu0 %v383
    %424 = vmatprep.subr.mxu0 0.0
    %425 = vmatpush1.msra.mxu0 %v384
    %426 = vmatprep.subr.mxu0 0.0
    %427 = vmatpush1.msra.mxu0 %v385
    %428 = vmatprep.subr.mxu0 0.0
    %429 = vmatpush1.msra.mxu0 %v386
    %430 = vmatprep.subr.mxu0 0.0
    %431 = vmatpush1.msra.mxu0 %v387
    %432 = vmatprep.subr.mxu0 0.0
    %433 = vmatpush1.msra.mxu0 %v388
    %434 = vmatprep.subr.mxu0 0.0
    %435 = vmatpush1.msra.mxu0 %v389
    %436 = vmatprep.subr.mxu0 0.0
    %437 = vmatpush1.msra.mxu0 %v390
    %438 = vmatprep.subr.mxu0 0.0
    %439 = vmatpush1.msra.mxu0 %v391
    %440 = vmatprep.subr.mxu0 0.0
    %441 = vmatpush1.msra.mxu0 0.0
    %442 = vmatprep.subr.mxu0 0.0
    %443 = vmatpush1.msra.mxu0 0.0
    %444 = vmatprep.subr.mxu0 0.0
    %445 = vmatpush1.msra.mxu0 0.0
    %446 = vmatprep.subr.mxu0 0.0
    %447 = vmatpush1.msra.mxu0 0.0
    %448 = vmatprep.subr.mxu0 0.0
    %449 = vmatpush1.msra.mxu0 0.0
    %450 = vmatprep.subr.mxu0 0.0
    %451 = vmatpush1.msra.mxu0 0.0
    %452 = vmatprep.subr.mxu0 0.0
    %453 = vmatpush1.msra.mxu0 0.0
    %454 = vmatprep.subr.mxu0 0.0
    %455 = vmatpush1.msra.mxu0 0.0
    %456 = vmatprep.subr.mxu0 0.0
    %457 = vmatpush1.msra.mxu0 0.0
    %458 = vmatprep.subr.mxu0 0.0
    %459 = vmatpush1.msra.mxu0 0.0
    %460 = vmatprep.subr.mxu0 0.0
    %461 = vmatpush1.msra.mxu0 0.0
    %462 = vmatprep.subr.mxu0 0.0
    %463 = vmatpush1.msra.mxu0 0.0
    %464 = vmatprep.subr.mxu0 0.0
    %465 = vmatpush1.msra.mxu0 0.0
    %466 = vmatprep.subr.mxu0 0.0
    %467 = vmatpush1.msra.mxu0 0.0
    %468 = vmatprep.subr.mxu0 0.0
    %469 = vmatpush1.msra.mxu0 0.0
    %470 = vmatprep.subr.mxu0 0.0
    %471 = vmatpush1.msra.mxu0 0.0
    %472 = vmatprep.mubr.f32.mxu0 0.0
    %473 = vmatmul.mubr.f32.gmra.mrb[0].mxu0 %v392
    %v474 = vpop.f32.mrb[0].mxu0
    %v475 = vadd.f32 0.0, %v474
    %v476 = vpop.f32.mrb[0].mxu0
    %477 = vmatprep.mubr.f32.mxu0 0.0
    %478 = vmatmul.mubr.f32.gmra.mrb[0].mxu0 %v393
    %v479 = vpop.f32.mrb[0].mxu0
    %v480 = vadd.f32 0.0, %v479
    %v481 = vpop.f32.mrb[0].mxu0
    %482 = vmatprep.mubr.f32.mxu0 0.0
    %483 = vmatmul.mubr.f32.gmra.mrb[0].mxu0 %v394
    %v484 = vpop.f32.mrb[0].mxu0
    %v485 = vadd.f32 0.0, %v484
    %v486 = vpop.f32.mrb[0].mxu0
    %487 = vmatprep.mubr.f32.mxu0 0.0
    %488 = vmatmul.mubr.f32.gmra.mrb[0].mxu0 %v395
    %v489 = vpop.f32.mrb[0].mxu0
    %v490 = vadd.f32 0.0, %v489
    %v491 = vpop.f32.mrb[0].mxu0
    %492 = vmatprep.mubr.f32.mxu0 0.0
    %493 = vmatmul.mubr.f32.gmra.mrb[0].mxu0 %v396
    %v494 = vpop.f32.mrb[0].mxu0
    %v495 = vadd.f32 0.0, %v494
    %v496 = vpop.f32.mrb[0].mxu0
    %497 = vmatprep.mubr.f32.mxu0 0.0
    %498 = vmatmul.mubr.f32.gmra.mrb[0].mxu0 %v397
    %v499 = vpop.f32.mrb[0].mxu0
    %v500 = vadd.f32 0.0, %v499
    %v501 = vpop.f32.mrb[0].mxu0
    %502 = vmatprep.mubr.f32.mxu0 0.0
    %503 = vmatmul.mubr.f32.gmra.mrb[0].mxu0 %v398
    %v504 = vpop.f32.mrb[0].mxu0
    %v505 = vadd.f32 0.0, %v504
    %v506 = vpop.f32.mrb[0].mxu0
    %507 = vmatprep.mubr.f32.mxu0 0.0
    %508 = vmatmul.mubr.f32.gmra.mrb[0].mxu0 %v399
    %v509 = vpop.f32.mrb[0].mxu0
    %v510 = vadd.f32 0.0, %v509
    %v511 = vpop.f32.mrb[0].mxu0
    %512 = vmatprep.mubr.f32.mxu0 0.0
    %513 = vmatmul.mubr.f32.gmra.mrb[0].mxu0 %v400
    %v514 = vpop.f32.mrb[0].mxu0
    %v515 = vadd.f32 0.0, %v514
    %v516 = vpop.f32.mrb[0].mxu0
    %517 = vmatprep.mubr.f32.mxu0 0.0
    %518 = vmatmul.mubr.f32.gmra.mrb[0].mxu0 %v401
    %v519 = vpop.f32.mrb[0].mxu0
    %v520 = vadd.f32 0.0, %v519
    %v521 = vpop.f32.mrb[0].mxu0
    %522 = vmatprep.mubr.f32.mxu0 0.0
    %523 = vmatmul.mubr.f32.gmra.mrb[0].mxu0 %v402
    %v524 = vpop.f32.mrb[0].mxu0
    %v525 = vadd.f32 0.0, %v524
    %v526 = vpop.f32.mrb[0].mxu0
    %527 = vmatprep.mubr.f32.mxu0 0.0
    %528 = vmatmul.mubr.f32.gmra.mrb[0].mxu0 %v403
    %v529 = vpop.f32.mrb[0].mxu0
    %v530 = vadd.f32 0.0, %v529
    %v531 = vpop.f32.mrb[0].mxu0
    %532 = vmatprep.mubr.f32.mxu0 0.0
    %533 = vmatmul.mubr.f32.gmra.mrb[0].mxu0 %v404
    %v534 = vpop.f32.mrb[0].mxu0
    %v535 = vadd.f32 0.0, %v534
    %v536 = vpop.f32.mrb[0].mxu0
    %537 = vmatprep.mubr.f32.mxu0 0.0
    %538 = vmatmul.mubr.f32.gmra.mrb[0].mxu0 %v405
    %v539 = vpop.f32.mrb[0].mxu0
    %v540 = vadd.f32 0.0, %v539
    %v541 = vpop.f32.mrb[0].mxu0
    %542 = vmatprep.mubr.f32.mxu0 0.0
    %543 = vmatmul.mubr.f32.gmra.mrb[0].mxu0 %v406
    %v544 = vpop.f32.mrb[0].mxu0
    %v545 = vadd.f32 0.0, %v544
    %v546 = vpop.f32.mrb[0].mxu0
    %547 = vmatprep.mubr.f32.mxu0 0.0
    %548 = vmatmul.mubr.f32.gmra.mrb[0].mxu0 %v407
    %v549 = vpop.f32.mrb[0].mxu0
    %v550 = vadd.f32 0.0, %v549
    %v551 = vpop.f32.mrb[0].mxu0
    %552 = vdwg.mxu0
    %553 = vmatprep.subr.mxu0 0.0
    %554 = vmatpush1.xpose.msra.mxu0 %v392
    %555 = vmatprep.subr.mxu0 0.0
    %556 = vmatpush1.xpose.msra.mxu0 %v393
    %557 = vmatprep.subr.mxu0 0.0
    %558 = vmatpush1.xpose.msra.mxu0 %v394
    %559 = vmatprep.subr.mxu0 0.0
    %560 = vmatpush1.xpose.msra.mxu0 %v395
    %561 = vmatprep.subr.mxu0 0.0
    %562 = vmatpush1.xpose.msra.mxu0 %v396
    %563 = vmatprep.subr.mxu0 0.0
    %564 = vmatpush1.xpose.msra.mxu0 %v397
    %565 = vmatprep.subr.mxu0 0.0
    %566 = vmatpush1.xpose.msra.mxu0 %v398
    %567 = vmatprep.subr.mxu0 0.0
    %568 = vmatpush1.xpose.msra.mxu0 %v399
    %569 = vmatprep.subr.mxu0 0.0
    %570 = vmatpush1.xpose.msra.mxu0 %v400
    %571 = vmatprep.subr.mxu0 0.0
    %572 = vmatpush1.xpose.msra.mxu0 %v401
    %573 = vmatprep.subr.mxu0 0.0
    %574 = vmatpush1.xpose.msra.mxu0 %v402
    %575 = vmatprep.subr.mxu0 0.0
    %576 = vmatpush1.xpose.msra.mxu0 %v403
    %577 = vmatprep.subr.mxu0 0.0
    %578 = vmatpush1.xpose.msra.mxu0 %v404
    %579 = vmatprep.subr.mxu0 0.0
    %580 = vmatpush1.xpose.msra.mxu0 %v405
    %581 = vmatprep.subr.mxu0 0.0
    %582 = vmatpush1.xpose.msra.mxu0 %v406
    %583 = vmatprep.subr.mxu0 0.0
    %584 = vmatpush1.xpose.msra.mxu0 %v407
    %585 = vmatprep.subr.mxu0 0.0
    %586 = vmatpush1.xpose.msra.mxu0 0.0
    %587 = vmatprep.subr.mxu0 0.0
    %588 = vmatpush1.xpose.msra.mxu0 0.0
    %589 = vmatprep.subr.mxu0 0.0
    %590 = vmatpush1.xpose.msra.mxu0 0.0
    %591 = vmatprep.subr.mxu0 0.0
    %592 = vmatpush1.xpose.msra.mxu0 0.0
    %593 = vmatprep.subr.mxu0 0.0
    %594 = vmatpush1.xpose.msra.mxu0 0.0
    %595 = vmatprep.subr.mxu0 0.0
    %596 = vmatpush1.xpose.msra.mxu0 0.0
    %597 = vmatprep.subr.mxu0 0.0
    %598 = vmatpush1.xpose.msra.mxu0 0.0
    %599 = vmatprep.subr.mxu0 0.0
    %600 = vmatpush1.xpose.msra.mxu0 0.0
    %601 = vmatprep.subr.mxu0 0.0
    %602 = vmatpush1.xpose.msra.mxu0 0.0
    %603 = vmatprep.subr.mxu0 0.0
    %604 = vmatpush1.xpose.msra.mxu0 0.0
    %605 = vmatprep.subr.mxu0 0.0
    %606 = vmatpush1.xpose.msra.mxu0 0.0
    %607 = vmatprep.subr.mxu0 0.0
    %608 = vmatpush1.xpose.msra.mxu0 0.0
    %609 = vmatprep.subr.mxu0 0.0
    %610 = vmatpush1.xpose.msra.mxu0 0.0
    %611 = vmatprep.subr.mxu0 0.0
    %612 = vmatpush1.xpose.msra.mxu0 0.0
    %613 = vmatprep.subr.mxu0 0.0
    %614 = vmatpush1.xpose.msra.mxu0 0.0
    %615 = vmatprep.subr.mxu0 0.0
    %616 = vmatpush1.xpose.msra.mxu0 0.0
    %617 = vmatprep.mubr.f32.mxu0 0.0
    %618 = vmatmul.mubr.f32.gmra.mrb[0].mxu0 %v475
    %v619 = vpop.f32.mrb[0].mxu0
    %v620 = vadd.f32 0.0, %v619
    %v621 = vpop.f32.mrb[0].mxu0
    %622 = vmatprep.mubr.f32.mxu0 0.0
    %623 = vmatmul.mubr.f32.gmra.mrb[0].mxu0 %v480
    %v624 = vpop.f32.mrb[0].mxu0
    %v625 = vadd.f32 0.0, %v624
    %v626 = vpop.f32.mrb[0].mxu0
    %627 = vmatprep.mubr.f32.mxu0 0.0
    %628 = vmatmul.mubr.f32.gmra.mrb[0].mxu0 %v485
    %v629 = vpop.f32.mrb[0].mxu0
    %v630 = vadd.f32 0.0, %v629
    %v631 = vpop.f32.mrb[0].mxu0
    %632 = vmatprep.mubr.f32.mxu0 0.0
    %633 = vmatmul.mubr.f32.gmra.mrb[0].mxu0 %v490
    %v634 = vpop.f32.mrb[0].mxu0
    %v635 = vadd.f32 0.0, %v634
    %v636 = vpop.f32.mrb[0].mxu0
    %637 = vmatprep.mubr.f32.mxu0 0.0
    %638 = vmatmul.mubr.f32.gmra.mrb[0].mxu0 %v495
    %v639 = vpop.f32.mrb[0].mxu0
    %v640 = vadd.f32 0.0, %v639
    %v641 = vpop.f32.mrb[0].mxu0
    %642 = vmatprep.mubr.f32.mxu0 0.0
    %643 = vmatmul.mubr.f32.gmra.mrb[0].mxu0 %v500
    %v644 = vpop.f32.mrb[0].mxu0
    %v645 = vadd.f32 0.0, %v644
    %v646 = vpop.f32.mrb[0].mxu0
    %647 = vmatprep.mubr.f32.mxu0 0.0
    %648 = vmatmul.mubr.f32.gmra.mrb[0].mxu0 %v505
    %v649 = vpop.f32.mrb[0].mxu0
    %v650 = vadd.f32 0.0, %v649
    %v651 = vpop.f32.mrb[0].mxu0
    %652 = vmatprep.mubr.f32.mxu0 0.0
    %653 = vmatmul.mubr.f32.gmra.mrb[0].mxu0 %v510
    %v654 = vpop.f32.mrb[0].mxu0
    %v655 = vadd.f32 0.0, %v654
    %v656 = vpop.f32.mrb[0].mxu0
    %657 = vmatprep.mubr.f32.mxu0 0.0
    %658 = vmatmul.mubr.f32.gmra.mrb[0].mxu0 %v515
    %v659 = vpop.f32.mrb[0].mxu0
    %v660 = vadd.f32 0.0, %v659
    %v661 = vpop.f32.mrb[0].mxu0
    %662 = vmatprep.mubr.f32.mxu0 0.0
    %663 = vmatmul.mubr.f32.gmra.mrb[0].mxu0 %v520
    %v664 = vpop.f32.mrb[0].mxu0
    %v665 = vadd.f32 0.0, %v664
    %v666 = vpop.f32.mrb[0].mxu0
    %667 = vmatprep.mubr.f32.mxu0 0.0
    %668 = vmatmul.mubr.f32.gmra.mrb[0].mxu0 %v525
    %v669 = vpop.f32.mrb[0].mxu0
    %v670 = vadd.f32 0.0, %v669
    %v671 = vpop.f32.mrb[0].mxu0
    %672 = vmatprep.mubr.f32.mxu0 0.0
    %673 = vmatmul.mubr.f32.gmra.mrb[0].mxu0 %v530
    %v674 = vpop.f32.mrb[0].mxu0
    %v675 = vadd.f32 0.0, %v674
    %v676 = vpop.f32.mrb[0].mxu0
    %677 = vmatprep.mubr.f32.mxu0 0.0
    %678 = vmatmul.mubr.f32.gmra.mrb[0].mxu0 %v535
    %v679 = vpop.f32.mrb[0].mxu0
    %v680 = vadd.f32 0.0, %v679
    %v681 = vpop.f32.mrb[0].mxu0
    %682 = vmatprep.mubr.f32.mxu0 0.0
    %683 = vmatmul.mubr.f32.gmra.mrb[0].mxu0 %v540
    %v684 = vpop.f32.mrb[0].mxu0
    %v685 = vadd.f32 0.0, %v684
    %v686 = vpop.f32.mrb[0].mxu0
    %687 = vmatprep.mubr.f32.mxu0 0.0
    %688 = vmatmul.mubr.f32.gmra.mrb[0].mxu0 %v545
    %v689 = vpop.f32.mrb[0].mxu0
    %v690 = vadd.f32 0.0, %v689
    %v691 = vpop.f32.mrb[0].mxu0
    %692 = vmatprep.mubr.f32.mxu0 0.0
    %693 = vmatmul.mubr.f32.gmra.mrb[0].mxu0 %v550
    %v694 = vpop.f32.mrb[0].mxu0
    %v695 = vadd.f32 0.0, %v694
    %v696 = vpop.f32.mrb[0].mxu0
    %697 = vdwg.mxu0
    %698 = vst [vmem:[#allocation8] sm:$0xff] %v620
    %699 = vst [vmem:[#allocation8 + $0x8] sm:$0xff] %v625
    %700 = vst [vmem:[#allocation8 + $0x10] sm:$0xff] %v630
    %701 = vst [vmem:[#allocation8 + $0x18] sm:$0xff] %v635
    %702 = vst [vmem:[#allocation8 + $0x20] sm:$0xff] %v640
    %703 = vst [vmem:[#allocation8 + $0x28] sm:$0xff] %v645
    %704 = vst [vmem:[#allocation8 + $0x30] sm:$0xff] %v650
    %705 = vst [vmem:[#allocation8 + $0x38] sm:$0xff] %v655
    %706 = vst [vmem:[#allocation8 + $0x40] sm:$0xff] %v660
    %707 = vst [vmem:[#allocation8 + $0x48] sm:$0xff] %v665
    %708 = vst [vmem:[#allocation8 + $0x50] sm:$0xff] %v670
    %709 = vst [vmem:[#allocation8 + $0x58] sm:$0xff] %v675
    %710 = vst [vmem:[#allocation8 + $0x60] sm:$0xff] %v680
    %711 = vst [vmem:[#allocation8 + $0x68] sm:$0xff] %v685
    %712 = vst [vmem:[#allocation8 + $0x70] sm:$0xff] %v690
    %713 = vst [vmem:[#allocation8 + $0x78] sm:$0xff] %v695
    // Predicated region
    $region26: #{tpu_custom_call.1} parent=1 // pred_check
      _
    $region27: #{tpu_custom_call.1} parent=1 // pred_check_branch
      %715 = sbr.rel (0) target = $region29
    $region28: #{tpu_custom_call.1} parent=1 // pred_region
      %s717 = ssub.s32 2048, 2048
      %718 = vsyncadd [#allocation4], %s717
      %s719 = sshll.u32 [#allocation8], 4
      %s720 = int_to_ptr.vmem [resolvable:$true] %s719
      %725 = dma.vmem_to_hbm [thread:$0]  %s720, 2048, %s3, [#allocation4], 128, 128, 8
    $region29: #{tpu_custom_call.1} parent=1 // pred_fallthru
      _
    // Predicated region
    $region30: #{tpu_custom_call.1} parent=1 // pred_check
      _
    $region31: #{tpu_custom_call.1} parent=1 // pred_check_branch
      %727 = sbr.rel (0) target = $region33
    $region32: #{tpu_custom_call.1} parent=1 // pred_region
      %728 = dma.done [#allocation4], 2048
    $region33: #{tpu_custom_call.1} parent=1 // pred_fallthru
      _
    %729 = vsyncpa [#allocation3], 1
    %730 = vsyncpa [#allocation6], 1
    %731 = vsyncpa [#allocation4], 1

</llo_original>
